<compile_context>
chip_gen: v5e
topology: v5e:2x2
jax: 0.10.0
libtpu: 0.0.40
codegen_flags: <defaults>
</compile_context>

<pallas_src>
import functools

import jax
import jax.numpy as jnp
from jax.experimental import pallas as pl
from jax.experimental.pallas import tpu as pltpu


def _round_up(x, m):
    return ((x + m - 1) // m) * m


def _compute_logits(x_ref, w_ref, b_ref):
    # x_ref: (TB, nc)   w_ref: (nlabels, nc)   b_ref: (1, nlabels)
    x = x_ref[...].astype(jnp.float32)
    w = w_ref[...].astype(jnp.float32)
    b = b_ref[...].astype(jnp.float32)
    # (TB, nc) x (nlabels, nc) contracting nc -> (TB, nlabels) on the MXU.
    return jax.lax.dot_general(
        x, w, (((1,), (1,)), ((), ())),
        preferred_element_type=jnp.float32) + b


def _full_logits_kernel(x_ref, w_ref, b_ref, out_ref):
    # get_features path: write the full (TB, nlabels) logit block.
    out_ref[...] = _compute_logits(x_ref, w_ref, b_ref).astype(out_ref.dtype)


def _best_logit_kernel(x_ref, w_ref, b_ref, out_ref):
    # take_best path: row-wise max over labels.
    logits = _compute_logits(x_ref, w_ref, b_ref)
    out_ref[...] = jnp.max(logits, axis=-1, keepdims=True).astype(out_ref.dtype)


def _masked_logit_kernel(x_ref, w_ref, b_ref, y_ref, out_ref):
    # default path: pick out[row, y[row]] with an in-register one-hot mask.
    logits = _compute_logits(x_ref, w_ref, b_ref)                 # (TB, nlabels)
    yv = y_ref[...]                                               # (TB, 1) int32
    lbl = jax.lax.broadcasted_iota(jnp.int32, logits.shape, 1)    # (TB, nlabels)
    sel = jnp.sum(jnp.where(lbl == yv, logits, 0.0),
                  axis=-1, keepdims=True)                          # (TB, 1)
    out_ref[...] = sel.astype(out_ref.dtype)


def _pick_block_rows(B, nc, requested):
    """Row-block size: multiple of 8 sublanes, capped by batch and a VMEM budget."""
    tb = _round_up(max(requested, 8), 8)
    # Keep the (double-buffered) input tile well under the scoped-VMEM default:
    # ~8 MiB per x buffer leaves headroom for weights/bias/logits/output.
    x_budget_bytes = 8 * 1024 * 1024
    max_tb = max(8, ((x_budget_bytes // max(4 * nc, 1)) // 8) * 8)
    tb = min(tb, max_tb)
    tb = min(tb, _round_up(B, 8))
    return tb


def linear_conditional_mask_logits(inp, weight, bias, y=None,
                                   take_best=False, get_features=False,
                                   block_rows=512):
    """inp: (B, nc) float, weight: (nlabels, nc), bias: (nlabels,), y: (B,) int."""
    B, nc = inp.shape
    nlabels, nc_w = weight.shape
    assert nc_w == nc
    assert bias.shape == (nlabels,)

    tb = _pick_block_rows(B, nc, block_rows)
    bp = _round_up(B, tb)
    grid = (bp // tb,)

    # Pad batch (only if needed); padded rows are discarded after the call.
    x_pad = inp if bp == B else jnp.pad(inp, ((0, bp - B), (0, 0)))

    bias2 = bias.reshape(1, nlabels)
    params = pltpu.CompilerParams(dimension_semantics=("parallel",))

    x_spec = pl.BlockSpec((tb, nc), lambda i: (i, 0))
    w_spec = pl.BlockSpec((nlabels, nc), lambda i: (0, 0))   # resident in VMEM
    b_spec = pl.BlockSpec((1, nlabels), lambda i: (0, 0))    # resident in VMEM

    if get_features:
        out = pl.pallas_call(
            _full_logits_kernel,
            out_shape=jax.ShapeDtypeStruct((bp, nlabels), inp.dtype),
            grid=grid,
            in_specs=[x_spec, w_spec, b_spec],
            out_specs=pl.BlockSpec((tb, nlabels), lambda i: (i, 0)),
            compiler_params=params,
        )(x_pad, weight, bias2)
        return out[:B]

    out_spec = pl.BlockSpec((tb, 1), lambda i: (i, 0))

    if take_best:
        out = pl.pallas_call(
            _best_logit_kernel,
            out_shape=jax.ShapeDtypeStruct((bp, 1), inp.dtype),
            grid=grid,
            in_specs=[x_spec, w_spec, b_spec],
            out_specs=out_spec,
            compiler_params=params,
        )(x_pad, weight, bias2)
        return out[:B, 0]

    assert y is not None
    y32 = y.reshape(-1).astype(jnp.int32)
    assert y32.shape[0] == B
    if bp != B:
        y32 = jnp.pad(y32, (0, bp - B))
    y_pad = y32.reshape(bp, 1)

    out = pl.pallas_call(
        _masked_logit_kernel,
        out_shape=jax.ShapeDtypeStruct((bp, 1), inp.dtype),
        grid=grid,
        in_specs=[x_spec, w_spec, b_spec, pl.BlockSpec((tb, 1), lambda i: (i, 0))],
        out_specs=out_spec,
        compiler_params=params,
    )(x_pad, weight, bias2, y_pad)
    return out[:B, 0]


if __name__ == "__main__":
    key = jax.random.PRNGKey(0)
    k_w, k_b, k_x, k_y = jax.random.split(key, 4)

    nc = 128        # input feature dim (lane-dense)
    nlabels = 10
    batch = 8

    weight = 0.05 * jax.random.normal(k_w, (nlabels, nc), dtype=jnp.float32)
    bias = 0.05 * jax.random.normal(k_b, (nlabels,), dtype=jnp.float32)
    x = jax.random.normal(k_x, (batch, nc), dtype=jnp.float32)
    y = jax.random.randint(k_y, (batch,), 0, nlabels, dtype=jnp.int32)

    # pure-JAX reference
    logits_ref = x @ weight.T + bias

    # default path: out[arange(B), y]
    out = jax.block_until_ready(
        linear_conditional_mask_logits(x, weight, bias, y=y))
    ref = logits_ref[jnp.arange(batch), y]
    assert out.shape == (batch,)
    assert jnp.allclose(out, ref, atol=1e-4, rtol=1e-4)

    # take_best path: max over labels
    out_best = jax.block_until_ready(
        linear_conditional_mask_logits(x, weight, bias, take_best=True))
    assert out_best.shape == (batch,)
    assert jnp.allclose(out_best, logits_ref.max(axis=1), atol=1e-4, rtol=1e-4)

    # get_features path: full logits
    feats = jax.block_until_ready(
        linear_conditional_mask_logits(x, weight, bias, get_features=True))
    assert feats.shape == (batch, nlabels)
    assert jnp.allclose(feats, logits_ref, atol=1e-4, rtol=1e-4)

    # non-multiple-of-8 batch exercises the padding path
    x6, y6 = x[:6], y[:6]
    out6 = jax.block_until_ready(
        linear_conditional_mask_logits(x6, weight, bias, y=y6))
    ref6 = (x6 @ weight.T + bias)[jnp.arange(6), y6]
    assert out6.shape == (6,)
    assert jnp.allclose(out6, ref6, atol=1e-4, rtol=1e-4)

    print("KERNEL_OK")
</pallas_src>

<mosaic_0001>
module attributes {stable_mosaic.version = 11 : i64} {
  func.func @_masked_logit_kernel(%arg0: i32, %arg1: memref<8x128xf32, #tpu.memory_space<vmem>>, %arg2: memref<10x128xf32, #tpu.memory_space<vmem>>, %arg3: memref<1x10xf32, #tpu.memory_space<vmem>>, %arg4: memref<8x1xi32, #tpu.memory_space<vmem>>, %arg5: memref<8x1xf32, #tpu.memory_space<vmem>>) attributes {dimension_semantics = [#tpu.dimension_semantics<parallel>], iteration_bounds = array<i64: 1>, scalar_prefetch = 0 : i64, scratch_operands = 0 : i64, tpu.core_type = #tpu.core_type<tc>, window_params = [{transform_indices = @transform_0, window_bounds = array<i64: 8, 128>}, {pipeline_mode = #tpu.pipeline_mode<synchronous>, transform_indices = @transform_1, window_bounds = array<i64: 10, 128>}, {pipeline_mode = #tpu.pipeline_mode<synchronous>, transform_indices = @transform_2, window_bounds = array<i64: 1, 10>}, {transform_indices = @transform_3, window_bounds = array<i64: 8, 1>}, {transform_indices = @transform_4, window_bounds = array<i64: 8, 1>}]} {
    %c0 = arith.constant 0 : index
    %c0_0 = arith.constant 0 : index
    %0 = vector.load %arg1[%c0, %c0_0] : memref<8x128xf32, #tpu.memory_space<vmem>>, vector<8x128xf32>
    %c0_1 = arith.constant 0 : index
    %c0_2 = arith.constant 0 : index
    %1 = vector.load %arg2[%c0_1, %c0_2] : memref<10x128xf32, #tpu.memory_space<vmem>>, vector<10x128xf32>
    %c0_3 = arith.constant 0 : index
    %c0_4 = arith.constant 0 : index
    %2 = vector.load %arg3[%c0_3, %c0_4] : memref<1x10xf32, #tpu.memory_space<vmem>>, vector<1x10xf32>
    %cst = arith.constant dense<0.000000e+00> : vector<8x10xf32>
    %3 = tpu.matmul %0, %1, %cst {dimension_numbers = #tpu.dot_dimension_numbers<[1], [1], [0], [0], [0, 0, 1, 0], [], []>} : vector<8x128xf32>, vector<10x128xf32>, vector<8x10xf32> -> vector<8x10xf32>
    %4 = vector.broadcast %2 : vector<1x10xf32> to vector<8x10xf32>
    %5 = arith.addf %3, %4 : vector<8x10xf32>
    %c0_5 = arith.constant 0 : index
    %c0_6 = arith.constant 0 : index
    %6 = vector.load %arg4[%c0_5, %c0_6] : memref<8x1xi32, #tpu.memory_space<vmem>>, vector<8x1xi32>
    %7 = tpu.iota {dimensions = array<i32: 1>} : vector<8x10xi32>
    %8 = vector.broadcast %6 : vector<8x1xi32> to vector<8x10xi32>
    %9 = arith.cmpi eq, %7, %8 : vector<8x10xi32>
    %cst_7 = arith.constant 0.000000e+00 : f32
    %10 = vector.broadcast %cst_7 : f32 to vector<8x10xf32>
    %11 = arith.select %9, %5, %10 : vector<8x10xi1>, vector<8x10xf32>
    %cst_8 = arith.constant dense<0.000000e+00> : vector<8xf32>
    %12 = vector.multi_reduction <add>, %11, %cst_8 [1] : vector<8x10xf32> to vector<8xf32>
    %13 = vector.shape_cast %12 : vector<8xf32> to vector<8x1xf32>
    %c0_9 = arith.constant 0 : index
    %c0_10 = arith.constant 0 : index
    %14 = vector.load %arg5[%c0_9, %c0_10] : memref<8x1xf32, #tpu.memory_space<vmem>>, vector<8x1xf32>
    tpu.vector_store %arg5[%c0_9, %c0_10], %13 {strides = array<i32>} : memref<8x1xf32, #tpu.memory_space<vmem>>, vector<8x1xf32>,
    return
  }
  func.func @transform_0(%arg0: i32) -> (i32, i32) {
    %c0_i32 = arith.constant 0 : i32
    %c0_i32_0 = arith.constant 0 : i32
    return %arg0, %c0_i32 : i32, i32
  }
  func.func @transform_1(%arg0: i32) -> (i32, i32) {
    %c0_i32 = arith.constant 0 : i32
    %c0_i32_0 = arith.constant 0 : i32
    %c0_i32_1 = arith.constant 0 : i32
    return %c0_i32, %c0_i32_0 : i32, i32
  }
  func.func @transform_2(%arg0: i32) -> (i32, i32) {
    %c0_i32 = arith.constant 0 : i32
    %c0_i32_0 = arith.constant 0 : i32
    %c0_i32_1 = arith.constant 0 : i32
    return %c0_i32, %c0_i32_0 : i32, i32
  }
  func.func @transform_3(%arg0: i32) -> (i32, i32) {
    %c0_i32 = arith.constant 0 : i32
    %c0_i32_0 = arith.constant 0 : i32
    return %arg0, %c0_i32 : i32, i32
  }
  func.func @transform_4(%arg0: i32) -> (i32, i32) {
    %c0_i32 = arith.constant 0 : i32
    %c0_i32_0 = arith.constant 0 : i32
    return %arg0, %c0_i32 : i32, i32
  }
}

</mosaic_0001>

<llo_original>
// kernel: tpu_custom_call.1
$region0: #{tpu_custom_call.1}
  #allocation0 [shape = 'u32[]', space=smem, size = 0x4, offset = 0x4, fixed_abs, tag = 'smem constant byte address 0x4 - core index']
  #allocation1 [shape = 'u32[72,128]{1,0:T(1,128)}', space=vmem, size = 0x9000, scoped, tag = 'internal scratch']
  %s0 = inlined_call_operand.vmem [shape: f32[8,128], index: 0, kind: input, shape index: {}]
  %s1 = inlined_call_operand.hbm [shape: f32[10,128], index: 1, kind: input, shape index: {}]
  %s2 = inlined_call_operand.vmem [shape: f32[1,10], index: 2, kind: input, shape index: {}]
  %s3 = inlined_call_operand.vmem [shape: s32[8,1], index: 3, kind: input, shape index: {}]
  %s4 = inlined_call_operand.vmem [shape: f32[8,1], index: 4, kind: output, shape index: {}]
  %s5 = sld [smem:[#allocation0]]
  $region30: #{tpu_custom_call.1} parent=0
    _
  %s7 = ssub.s32 1, %s5
  %s8 = scalar_select 0, %s7, %s5
  $region1: #{tpu_custom_call.1} parent=0
    #allocation2 [shape = 'u8[8192]{0}', space=vmem, size = 0x2000, scoped, tag = 'input window, operand 1, single buffered']
    #allocation3 [shape = 's32[1]{0}', space=sflag, size = 0x4, scoped, tag = 'scoped memory for tpu_custom_call.1']
    %9 = vsyncpa [#allocation3], 0
    // Predicated region
    $region2: #{tpu_custom_call.1} parent=1 // pred_check
      _
    $region3: #{tpu_custom_call.1} parent=1 // pred_check_branch
      %11 = sbr.rel (0) target = $region5
    $region4: #{tpu_custom_call.1} parent=1 // pred_region
      _
    $region5: #{tpu_custom_call.1} parent=1 // pred_fallthru
      _
    // Predicated region
    $region6: #{tpu_custom_call.1} parent=1 // pred_check
      _
    $region7: #{tpu_custom_call.1} parent=1 // pred_check_branch
      %13 = sbr.rel (0) target = $region9
    $region8: #{tpu_custom_call.1} parent=1 // pred_region
      %15 = vsyncadd [#allocation3], 0
      %s16 = sshll.u32 %s1, 4
      %s17 = int_to_ptr.hbm [resolvable:$true] %s16
      %s18 = sshll.u32 [#allocation2], 4
      %s19 = int_to_ptr.vmem [resolvable:$true] %s18
      %24 = dma.hbm_to_vmem [thread:$0]  %s17, 256, %s19, [#allocation3], 128, 128, 8
    $region9: #{tpu_custom_call.1} parent=1 // pred_fallthru
      _
    // Predicated region
    $region10: #{tpu_custom_call.1} parent=1 // pred_check
      _
    $region11: #{tpu_custom_call.1} parent=1 // pred_check_branch
      %26 = sbr.rel (0) target = $region13
    $region12: #{tpu_custom_call.1} parent=1 // pred_region
      _
    $region13: #{tpu_custom_call.1} parent=1 // pred_fallthru
      _
    // Predicated region
    $region14: #{tpu_custom_call.1} parent=1 // pred_check
      _
    $region15: #{tpu_custom_call.1} parent=1 // pred_check_branch
      %28 = sbr.rel (0) target = $region17
    $region16: #{tpu_custom_call.1} parent=1 // pred_region
      _
    $region17: #{tpu_custom_call.1} parent=1 // pred_fallthru
      _
    // Predicated region
    $region18: #{tpu_custom_call.1} parent=1 // pred_check
      _
    $region19: #{tpu_custom_call.1} parent=1 // pred_check_branch
      %30 = sbr.rel (0) target = $region21
    $region20: #{tpu_custom_call.1} parent=1 // pred_region
      %32 = dma.done [#allocation3], 256
    $region21: #{tpu_custom_call.1} parent=1 // pred_fallthru
      _
    %v33 = vld [vmem:[%s0] sm:$0xff]
    %v34 = vld [vmem:[#allocation2] sm:$0xff]
    %v35 = vld [vmem:[#allocation2 + $0x8] sm:$0x3]
    %v36 = vld [vmem:[%s2] sm:$0x1]
    %v38 = vperm.slane %v36, 0
    %40 = vmatpush.xpose.msra.mxu0 0.0
    %41 = vmatpush.xpose.msra.mxu0 0.0
    %42 = vmatpush.xpose.msra.mxu0 0.0
    %43 = vmatpush.xpose.msra.mxu0 0.0
    %44 = vmatpush.xpose.msra.mxu0 0.0
    %45 = vmatpush.xpose.msra.mxu0 0.0
    %46 = vmatpush.xpose.msra.mxu0 0.0
    %47 = vmatpush.xpose.msra.mxu0 0.0
    %48 = vmatpush.xpose.msra.mxu0 0.0
    %49 = vmatpush.xpose.msra.mxu0 0.0
    %50 = vmatpush.xpose.msra.mxu0 0.0
    %51 = vmatpush.xpose.msra.mxu0 0.0
    %52 = vmatpush.xpose.msra.mxu0 0.0
    %53 = vmatpush.xpose.msra.mxu0 0.0
    %54 = vmatpush.xpose.msra.mxu0 %v35
    %55 = vmatpush.xpose.msra.mxu0 %v34
    %56 = vmatmul.f32.gmra.mxu0 %v33
    %v57 = vpop.f32.mrf.mxu0
    %v58 = vadd.f32 %v38, %v57
    %59 = vdwg.mxu0
    %v60 = vld [vmem:[%s3] sm:$0xff]
    %v61 = vlaneseq
    %v62 = vand.u32 %v61, 127
    %63 = vset.pattern.permute.xlu0 0
    %64 = vperm.xlu0 %63, %v60
    %v65 = vpop.permute.xlu0 %64
    %vm66 = vcmp.eq.s32.totalorder %v62, %v65
    %v67 = vsel %vm66, %v58, 0.0
    %vm68 = vcmask 80896
    %v69 = vsel %vm68, %v67, 0.0
    %70 = vadd.xlane.f32.xlu0 %v69
    %v71 = vpop.xlane.xlu0 %70
    %vm72 = vcmask 7168
    %73 = vst.msk [vmem:[%s4] sm:$0xff] %vm72, %v71
    // Predicated region
    $region22: #{tpu_custom_call.1} parent=1 // pred_check
      _
    $region23: #{tpu_custom_call.1} parent=1 // pred_check_branch
      %75 = sbr.rel (0) target = $region25
    $region24: #{tpu_custom_call.1} parent=1 // pred_region
      _
    $region25: #{tpu_custom_call.1} parent=1 // pred_fallthru
      _
    // Predicated region
    $region26: #{tpu_custom_call.1} parent=1 // pred_check
      _
    $region27: #{tpu_custom_call.1} parent=1 // pred_check_branch
      %77 = sbr.rel (0) target = $region29
    $region28: #{tpu_custom_call.1} parent=1 // pred_region
      _
    $region29: #{tpu_custom_call.1} parent=1 // pred_fallthru
      _
    %78 = vsyncpa [#allocation3], 1

</llo_original>
